<compile_context>
chip_gen: v6e
topology: v6e:2x2x1
jax: 0.10.0
libtpu: 0.0.40
codegen_flags: <defaults>
</compile_context>

<pallas_src>
import math

import jax
import jax.numpy as jnp
import numpy as np
from jax.experimental import pallas as pl
from jax.experimental.pallas import tpu as pltpu

EPS = 1e-5      # nn.BatchNorm1d default eps
SLOPE = 0.01    # F.leaky_relu default negative_slope


def _full_spec(shape):
    nd = len(shape)
    return pl.BlockSpec(shape, lambda i, _nd=nd: (0,) * _nd)


def _make_kernel(G, cnt):
    inv_cnt = 1.0 / cnt

    def bn(y, gamma, beta, mask):
        # training-mode BatchNorm1d, single pass: masked sum & sum-of-squares
        ym = y * mask
        mean = jnp.sum(ym, axis=1, keepdims=True) * inv_cnt
        msq = jnp.sum(ym * y, axis=1, keepdims=True) * inv_cnt
        var = jnp.maximum(msq - mean * mean, 0.0)
        inv = jax.lax.rsqrt(var + EPS)
        return (y - mean) * (inv * gamma) + beta

    def stack3(v):
        # rows: [ v[g-1] ; v[g] ; v[g+1] ]   (in-register im2col for k=3)
        # roll wrap-around touches only pad columns, which are masked/discarded
        prev = pltpu.roll(v, shift=1, axis=1)       # position g holds v[g-1]
        nxt = pltpu.roll(v, shift=G - 1, axis=1)    # position g holds v[g+1]
        return jnp.concatenate([prev, v, nxt], axis=0)

    def kernel(x_ref, mask_ref, w1_ref, w2_ref, ws_ref, p_ref, out_ref):
        x = x_ref[...]              # (c_in_p, G)
        mask = mask_ref[...]        # (1, G)
        p = p_ref[...]              # (c_out_p, 9)
        b1, g1, be1 = p[:, 0:1], p[:, 1:2], p[:, 2:3]
        b2, g2, be2 = p[:, 3:4], p[:, 4:5], p[:, 5:6]
        bs, gs, bes = p[:, 6:7], p[:, 7:8], p[:, 8:9]

        # ---- conv1 (k=3, pad=1) as a single MXU matmul + BN + leaky_relu ----
        h = jnp.dot(w1_ref[...], stack3(x),
                    preferred_element_type=jnp.float32) + b1
        h = bn(h, g1, be1, mask)
        h = jnp.where(h > 0, h, SLOPE * h)          # leaky_relu
        h = h * mask                                # zero pad columns for conv2

        # ---- shortcut: 1x1 conv + BN, written straight into the output ----
        s = jnp.dot(ws_ref[...], x, preferred_element_type=jnp.float32) + bs
        out_ref[...] = bn(s, gs, bes, mask)

        # ---- conv2 (k=3, pad=1) + BN, accumulated onto the shortcut ----
        h2 = jnp.dot(w2_ref[...], stack3(h),
                     preferred_element_type=jnp.float32) + b2
        out_ref[...] = out_ref[...] + bn(h2, g2, be2, mask)

    return kernel


def residual_block_forward(x, params):
    """x: (N, C_in, L) float32 (PyTorch NCL). Returns (N, C_out, L)."""
    n, c_in, length = x.shape
    c_out, _, ksize = params["w1"].shape
    assert ksize == 3 and params["w2"].shape[2] == 3, "kernel assumes k=3, pad=1"

    f32 = jnp.float32
    # sublane-tile aligned channel counts
    c_in_p = -(-c_in // 8) * 8
    c_out_p = -(-c_out // 8) * 8
    # per-sample frame length: >= L+2 (room for the conv zero pads) and chosen
    # so G = n*lf is a multiple of 128 (lane-dense everything)
    m = 128 // math.gcd(n, 128)
    lf = -(-(length + 2) // m) * m
    G = n * lf
    cnt = float(n * length)     # valid (batch, position) pairs per channel

    # ---- glue: one pad (channel + frame), transpose, reshape ----
    x_pad = jnp.pad(x.astype(f32),
                    ((0, 0), (0, c_in_p - c_in), (1, lf - length - 1)))
    x_frame = jnp.transpose(x_pad, (1, 0, 2)).reshape(c_in_p, G)

    mask = jnp.pad(jnp.ones((n, length), f32),
                   ((0, 0), (1, lf - length - 1))).reshape(1, G)

    def stack_w(w, ci_p):
        co, ci, k = w.shape
        wp = jnp.pad(w.astype(f32), ((0, c_out_p - co), (0, ci_p - ci), (0, 0)))
        # column k*ci_p + i holds w[:, i, k]  (matches stack3 row order)
        return jnp.transpose(wp, (0, 2, 1)).reshape(c_out_p, k * ci_p)

    w1s = stack_w(params["w1"], c_in_p)                      # (c_out_p, 3*c_in_p)
    w2s = stack_w(params["w2"], c_out_p)                     # (c_out_p, 3*c_out_p)
    ws = jnp.pad(params["ws"][:, :, 0].astype(f32),
                 ((0, c_out_p - c_out), (0, c_in_p - c_in)))  # (c_out_p, c_in_p)

    # pack the 9 per-channel vectors into a single array (one DMA)
    pvec = jnp.stack([params["b1"], params["g1"], params["be1"],
                      params["b2"], params["g2"], params["be2"],
                      params["bs"], params["gs"], params["bes"]],
                     axis=1).astype(f32)
    pvec = jnp.pad(pvec, ((0, c_out_p - c_out), (0, 0)))      # (c_out_p, 9)

    kernel = _make_kernel(G, cnt)
    args = [x_frame, mask, w1s, w2s, ws, pvec]

    out_frame = pl.pallas_call(
        kernel,
        out_shape=jax.ShapeDtypeStruct((c_out_p, G), f32),
        grid=(1,),
        in_specs=[_full_spec(a.shape) for a in args],
        out_specs=_full_spec((c_out_p, G)),
        compiler_params=pltpu.CompilerParams(
            dimension_semantics=("arbitrary",)),
    )(*args)

    # ---- glue: drop pad columns / pad channels, back to NCL ----
    out = out_frame.reshape(c_out_p, n, lf)[:c_out, :, 1:length + 1]
    return jnp.transpose(out, (1, 0, 2))


# ---------------- pure-JAX reference (for correctness check) ----------------
def ref_forward(x, p):
    def conv1d(x, w, b):
        k = w.shape[2]
        pad = (k - 1) // 2
        L = x.shape[2]
        xp = jnp.pad(x, ((0, 0), (0, 0), (pad, pad)))
        out = sum(jnp.einsum('oi,nil->nol', w[:, :, kk], xp[:, :, kk:kk + L])
                  for kk in range(k))
        return out + b[None, :, None]

    def bn(y, g, b):
        mean = y.mean(axis=(0, 2), keepdims=True)
        var = ((y - mean) ** 2).mean(axis=(0, 2), keepdims=True)
        return (y - mean) / jnp.sqrt(var + EPS) * g[None, :, None] + b[None, :, None]

    h = conv1d(x, p["w1"], p["b1"])
    h = bn(h, p["g1"], p["be1"])
    h = jnp.where(h > 0, h, SLOPE * h)
    h = conv1d(h, p["w2"], p["b2"])
    h = bn(h, p["g2"], p["be2"])
    s = conv1d(x, p["ws"], p["bs"])
    s = bn(s, p["gs"], p["bes"])
    return h + s


if __name__ == "__main__":
    N, C_IN, C_OUT, L, K = 2, 4, 8, 16, 3   # in_channels != out_channels -> conv shortcut

    key = jax.random.PRNGKey(0)
    keys = jax.random.split(key, 13)

    def u(k, shape, scale):
        return jax.random.uniform(k, shape, jnp.float32, -1.0, 1.0) * scale

    params = {
        "w1": u(keys[1], (C_OUT, C_IN, K), 1.0 / np.sqrt(C_IN * K)),
        "b1": u(keys[2], (C_OUT,), 1.0 / np.sqrt(C_IN * K)),
        "g1": 1.0 + 0.1 * u(keys[3], (C_OUT,), 1.0),
        "be1": 0.1 * u(keys[4], (C_OUT,), 1.0),
        "w2": u(keys[5], (C_OUT, C_OUT, K), 1.0 / np.sqrt(C_OUT * K)),
        "b2": u(keys[6], (C_OUT,), 1.0 / np.sqrt(C_OUT * K)),
        "g2": 1.0 + 0.1 * u(keys[7], (C_OUT,), 1.0),
        "be2": 0.1 * u(keys[8], (C_OUT,), 1.0),
        "ws": u(keys[9], (C_OUT, C_IN, 1), 1.0 / np.sqrt(C_IN)),
        "bs": u(keys[10], (C_OUT,), 1.0 / np.sqrt(C_IN)),
        "gs": 1.0 + 0.1 * u(keys[11], (C_OUT,), 1.0),
        "bes": 0.1 * u(keys[12], (C_OUT,), 1.0),
    }
    x = jax.random.normal(keys[0], (N, C_IN, L), jnp.float32)

    out = jax.block_until_ready(residual_block_forward(x, params))
    ref = jax.block_until_ready(ref_forward(x, params))

    assert out.shape == (N, C_OUT, L), out.shape
    np.testing.assert_allclose(np.asarray(out), np.asarray(ref),
                               rtol=1e-3, atol=1e-3)
    print("KERNEL_OK")
</pallas_src>

<mosaic_0001>
module attributes {stable_mosaic.version = 11 : i64} {
  func.func @kernel(%arg0: i32, %arg1: memref<8x128xf32, #tpu.memory_space<vmem>>, %arg2: memref<1x128xf32, #tpu.memory_space<vmem>>, %arg3: memref<8x24xf32, #tpu.memory_space<vmem>>, %arg4: memref<8x24xf32, #tpu.memory_space<vmem>>, %arg5: memref<8x8xf32, #tpu.memory_space<vmem>>, %arg6: memref<8x9xf32, #tpu.memory_space<vmem>>, %arg7: memref<8x128xf32, #tpu.memory_space<vmem>>) attributes {dimension_semantics = [#tpu.dimension_semantics<arbitrary>], iteration_bounds = array<i64: 1>, scalar_prefetch = 0 : i64, scratch_operands = 0 : i64, tpu.core_type = #tpu.core_type<tc>, window_params = [{pipeline_mode = #tpu.pipeline_mode<synchronous>, transform_indices = @transform_0, window_bounds = array<i64: 8, 128>}, {pipeline_mode = #tpu.pipeline_mode<synchronous>, transform_indices = @transform_1, window_bounds = array<i64: 1, 128>}, {pipeline_mode = #tpu.pipeline_mode<synchronous>, transform_indices = @transform_2, window_bounds = array<i64: 8, 24>}, {pipeline_mode = #tpu.pipeline_mode<synchronous>, transform_indices = @transform_3, window_bounds = array<i64: 8, 24>}, {pipeline_mode = #tpu.pipeline_mode<synchronous>, transform_indices = @transform_4, window_bounds = array<i64: 8, 8>}, {pipeline_mode = #tpu.pipeline_mode<synchronous>, transform_indices = @transform_5, window_bounds = array<i64: 8, 9>}, {pipeline_mode = #tpu.pipeline_mode<synchronous>, transform_indices = @transform_6, window_bounds = array<i64: 8, 128>}]} {
    %c0 = arith.constant 0 : index
    %c0_0 = arith.constant 0 : index
    %0 = vector.load %arg1[%c0, %c0_0] : memref<8x128xf32, #tpu.memory_space<vmem>>, vector<8x128xf32>
    %c0_1 = arith.constant 0 : index
    %c0_2 = arith.constant 0 : index
    %1 = vector.load %arg2[%c0_1, %c0_2] : memref<1x128xf32, #tpu.memory_space<vmem>>, vector<1x128xf32>
    %c0_3 = arith.constant 0 : index
    %c0_4 = arith.constant 0 : index
    %2 = vector.load %arg6[%c0_3, %c0_4] : memref<8x9xf32, #tpu.memory_space<vmem>>, vector<8x9xf32>
    %3 = vector.extract_strided_slice %2 {offsets = [0, 0], sizes = [8, 1], strides = [1, 1]} : vector<8x9xf32> to vector<8x1xf32>
    %4 = vector.extract_strided_slice %2 {offsets = [0, 1], sizes = [8, 1], strides = [1, 1]} : vector<8x9xf32> to vector<8x1xf32>
    %5 = vector.extract_strided_slice %2 {offsets = [0, 2], sizes = [8, 1], strides = [1, 1]} : vector<8x9xf32> to vector<8x1xf32>
    %6 = vector.extract_strided_slice %2 {offsets = [0, 3], sizes = [8, 1], strides = [1, 1]} : vector<8x9xf32> to vector<8x1xf32>
    %7 = vector.extract_strided_slice %2 {offsets = [0, 4], sizes = [8, 1], strides = [1, 1]} : vector<8x9xf32> to vector<8x1xf32>
    %8 = vector.extract_strided_slice %2 {offsets = [0, 5], sizes = [8, 1], strides = [1, 1]} : vector<8x9xf32> to vector<8x1xf32>
    %9 = vector.extract_strided_slice %2 {offsets = [0, 6], sizes = [8, 1], strides = [1, 1]} : vector<8x9xf32> to vector<8x1xf32>
    %10 = vector.extract_strided_slice %2 {offsets = [0, 7], sizes = [8, 1], strides = [1, 1]} : vector<8x9xf32> to vector<8x1xf32>
    %11 = vector.extract_strided_slice %2 {offsets = [0, 8], sizes = [8, 1], strides = [1, 1]} : vector<8x9xf32> to vector<8x1xf32>
    %c0_5 = arith.constant 0 : index
    %c0_6 = arith.constant 0 : index
    %12 = vector.load %arg3[%c0_5, %c0_6] : memref<8x24xf32, #tpu.memory_space<vmem>>, vector<8x24xf32>
    %c1_i32 = arith.constant 1 : i32
    %13 = tpu.dynamic_rotate %0 by %c1_i32 dim 1 : vector<8x128xf32>, i32 -> vector<8x128xf32>
    %c127_i32 = arith.constant 127 : i32
    %14 = tpu.dynamic_rotate %0 by %c127_i32 dim 1 : vector<8x128xf32>, i32 -> vector<8x128xf32>
    %15 = tpu.concatenate %13, %0, %14 in 0 : vector<8x128xf32>, vector<8x128xf32>, vector<8x128xf32> -> vector<24x128xf32>
    %cst = arith.constant dense<0.000000e+00> : vector<8x128xf32>
    %16 = tpu.matmul %12, %15, %cst {dimension_numbers = #tpu.dot_dimension_numbers<[1], [0], [0], [1], [0, 0, 1, 1], [], []>} : vector<8x24xf32>, vector<24x128xf32>, vector<8x128xf32> -> vector<8x128xf32>
    %17 = vector.broadcast %3 : vector<8x1xf32> to vector<8x128xf32>
    %18 = arith.addf %16, %17 : vector<8x128xf32>
    %19 = vector.broadcast %1 : vector<1x128xf32> to vector<8x128xf32>
    %20 = arith.mulf %18, %19 : vector<8x128xf32>
    %cst_7 = arith.constant dense<0.000000e+00> : vector<8xf32>
    %21 = vector.multi_reduction <add>, %20, %cst_7 [1] : vector<8x128xf32> to vector<8xf32>
    %22 = vector.shape_cast %21 : vector<8xf32> to vector<8x1xf32>
    %cst_8 = arith.constant 3.125000e-02 : f32
    %23 = vector.broadcast %cst_8 : f32 to vector<8x1xf32>
    %24 = arith.mulf %22, %23 : vector<8x1xf32>
    %25 = arith.mulf %20, %18 : vector<8x128xf32>
    %cst_9 = arith.constant dense<0.000000e+00> : vector<8xf32>
    %26 = vector.multi_reduction <add>, %25, %cst_9 [1] : vector<8x128xf32> to vector<8xf32>
    %27 = vector.shape_cast %26 : vector<8xf32> to vector<8x1xf32>
    %cst_10 = arith.constant 3.125000e-02 : f32
    %28 = vector.broadcast %cst_10 : f32 to vector<8x1xf32>
    %29 = arith.mulf %27, %28 : vector<8x1xf32>
    %30 = arith.mulf %24, %24 : vector<8x1xf32>
    %31 = arith.subf %29, %30 : vector<8x1xf32>
    %cst_11 = arith.constant 0.000000e+00 : f32
    %32 = vector.broadcast %cst_11 : f32 to vector<8x1xf32>
    %33 = arith.maximumf %31, %32 : vector<8x1xf32>
    %cst_12 = arith.constant 9.99999974E-6 : f32
    %34 = vector.broadcast %cst_12 : f32 to vector<8x1xf32>
    %35 = arith.addf %33, %34 : vector<8x1xf32>
    %36 = math.rsqrt %35 : vector<8x1xf32>
    %37 = vector.broadcast %24 : vector<8x1xf32> to vector<8x128xf32>
    %38 = arith.subf %18, %37 : vector<8x128xf32>
    %39 = arith.mulf %36, %4 : vector<8x1xf32>
    %40 = vector.broadcast %39 : vector<8x1xf32> to vector<8x128xf32>
    %41 = arith.mulf %38, %40 : vector<8x128xf32>
    %42 = vector.broadcast %5 : vector<8x1xf32> to vector<8x128xf32>
    %43 = arith.addf %41, %42 : vector<8x128xf32>
    %cst_13 = arith.constant 0.000000e+00 : f32
    %44 = vector.broadcast %cst_13 : f32 to vector<8x128xf32>
    %45 = arith.cmpf ogt, %43, %44 : vector<8x128xf32>
    %cst_14 = arith.constant 0.00999999977 : f32
    %46 = vector.broadcast %cst_14 : f32 to vector<8x128xf32>
    %47 = arith.mulf %46, %43 : vector<8x128xf32>
    %48 = arith.select %45, %43, %47 : vector<8x128xi1>, vector<8x128xf32>
    %49 = vector.broadcast %1 : vector<1x128xf32> to vector<8x128xf32>
    %50 = arith.mulf %48, %49 : vector<8x128xf32>
    %c0_15 = arith.constant 0 : index
    %c0_16 = arith.constant 0 : index
    %51 = vector.load %arg5[%c0_15, %c0_16] : memref<8x8xf32, #tpu.memory_space<vmem>>, vector<8x8xf32>
    %cst_17 = arith.constant dense<0.000000e+00> : vector<8x128xf32>
    %52 = tpu.matmul %51, %0, %cst_17 {dimension_numbers = #tpu.dot_dimension_numbers<[1], [0], [0], [1], [0, 0, 1, 1], [], []>} : vector<8x8xf32>, vector<8x128xf32>, vector<8x128xf32> -> vector<8x128xf32>
    %53 = vector.broadcast %9 : vector<8x1xf32> to vector<8x128xf32>
    %54 = arith.addf %52, %53 : vector<8x128xf32>
    %55 = vector.broadcast %1 : vector<1x128xf32> to vector<8x128xf32>
    %56 = arith.mulf %54, %55 : vector<8x128xf32>
    %cst_18 = arith.constant dense<0.000000e+00> : vector<8xf32>
    %57 = vector.multi_reduction <add>, %56, %cst_18 [1] : vector<8x128xf32> to vector<8xf32>
    %58 = vector.shape_cast %57 : vector<8xf32> to vector<8x1xf32>
    %cst_19 = arith.constant 3.125000e-02 : f32
    %59 = vector.broadcast %cst_19 : f32 to vector<8x1xf32>
    %60 = arith.mulf %58, %59 : vector<8x1xf32>
    %61 = arith.mulf %56, %54 : vector<8x128xf32>
    %cst_20 = arith.constant dense<0.000000e+00> : vector<8xf32>
    %62 = vector.multi_reduction <add>, %61, %cst_20 [1] : vector<8x128xf32> to vector<8xf32>
    %63 = vector.shape_cast %62 : vector<8xf32> to vector<8x1xf32>
    %cst_21 = arith.constant 3.125000e-02 : f32
    %64 = vector.broadcast %cst_21 : f32 to vector<8x1xf32>
    %65 = arith.mulf %63, %64 : vector<8x1xf32>
    %66 = arith.mulf %60, %60 : vector<8x1xf32>
    %67 = arith.subf %65, %66 : vector<8x1xf32>
    %cst_22 = arith.constant 0.000000e+00 : f32
    %68 = vector.broadcast %cst_22 : f32 to vector<8x1xf32>
    %69 = arith.maximumf %67, %68 : vector<8x1xf32>
    %cst_23 = arith.constant 9.99999974E-6 : f32
    %70 = vector.broadcast %cst_23 : f32 to vector<8x1xf32>
    %71 = arith.addf %69, %70 : vector<8x1xf32>
    %72 = math.rsqrt %71 : vector<8x1xf32>
    %73 = vector.broadcast %60 : vector<8x1xf32> to vector<8x128xf32>
    %74 = arith.subf %54, %73 : vector<8x128xf32>
    %75 = arith.mulf %72, %10 : vector<8x1xf32>
    %76 = vector.broadcast %75 : vector<8x1xf32> to vector<8x128xf32>
    %77 = arith.mulf %74, %76 : vector<8x128xf32>
    %78 = vector.broadcast %11 : vector<8x1xf32> to vector<8x128xf32>
    %79 = arith.addf %77, %78 : vector<8x128xf32>
    %c0_24 = arith.constant 0 : index
    %c0_25 = arith.constant 0 : index
    %80 = vector.load %arg7[%c0_24, %c0_25] : memref<8x128xf32, #tpu.memory_space<vmem>>, vector<8x128xf32>
    tpu.vector_store %arg7[%c0_24, %c0_25], %79 {strides = array<i32>} : memref<8x128xf32, #tpu.memory_space<vmem>>, vector<8x128xf32>,
    %c0_26 = arith.constant 0 : index
    %c0_27 = arith.constant 0 : index
    %81 = vector.load %arg4[%c0_26, %c0_27] : memref<8x24xf32, #tpu.memory_space<vmem>>, vector<8x24xf32>
    %c1_i32_28 = arith.constant 1 : i32
    %82 = tpu.dynamic_rotate %50 by %c1_i32_28 dim 1 : vector<8x128xf32>, i32 -> vector<8x128xf32>
    %c127_i32_29 = arith.constant 127 : i32
    %83 = tpu.dynamic_rotate %50 by %c127_i32_29 dim 1 : vector<8x128xf32>, i32 -> vector<8x128xf32>
    %84 = tpu.concatenate %82, %50, %83 in 0 : vector<8x128xf32>, vector<8x128xf32>, vector<8x128xf32> -> vector<24x128xf32>
    %cst_30 = arith.constant dense<0.000000e+00> : vector<8x128xf32>
    %85 = tpu.matmul %81, %84, %cst_30 {dimension_numbers = #tpu.dot_dimension_numbers<[1], [0], [0], [1], [0, 0, 1, 1], [], []>} : vector<8x24xf32>, vector<24x128xf32>, vector<8x128xf32> -> vector<8x128xf32>
    %86 = vector.broadcast %6 : vector<8x1xf32> to vector<8x128xf32>
    %87 = arith.addf %85, %86 : vector<8x128xf32>
    %c0_31 = arith.constant 0 : index
    %c0_32 = arith.constant 0 : index
    %88 = vector.load %arg7[%c0_31, %c0_32] : memref<8x128xf32, #tpu.memory_space<vmem>>, vector<8x128xf32>
    %89 = vector.broadcast %1 : vector<1x128xf32> to vector<8x128xf32>
    %90 = arith.mulf %87, %89 : vector<8x128xf32>
    %cst_33 = arith.constant dense<0.000000e+00> : vector<8xf32>
    %91 = vector.multi_reduction <add>, %90, %cst_33 [1] : vector<8x128xf32> to vector<8xf32>
    %92 = vector.shape_cast %91 : vector<8xf32> to vector<8x1xf32>
    %cst_34 = arith.constant 3.125000e-02 : f32
    %93 = vector.broadcast %cst_34 : f32 to vector<8x1xf32>
    %94 = arith.mulf %92, %93 : vector<8x1xf32>
    %95 = arith.mulf %90, %87 : vector<8x128xf32>
    %cst_35 = arith.constant dense<0.000000e+00> : vector<8xf32>
    %96 = vector.multi_reduction <add>, %95, %cst_35 [1] : vector<8x128xf32> to vector<8xf32>
    %97 = vector.shape_cast %96 : vector<8xf32> to vector<8x1xf32>
    %cst_36 = arith.constant 3.125000e-02 : f32
    %98 = vector.broadcast %cst_36 : f32 to vector<8x1xf32>
    %99 = arith.mulf %97, %98 : vector<8x1xf32>
    %100 = arith.mulf %94, %94 : vector<8x1xf32>
    %101 = arith.subf %99, %100 : vector<8x1xf32>
    %cst_37 = arith.constant 0.000000e+00 : f32
    %102 = vector.broadcast %cst_37 : f32 to vector<8x1xf32>
    %103 = arith.maximumf %101, %102 : vector<8x1xf32>
    %cst_38 = arith.constant 9.99999974E-6 : f32
    %104 = vector.broadcast %cst_38 : f32 to vector<8x1xf32>
    %105 = arith.addf %103, %104 : vector<8x1xf32>
    %106 = math.rsqrt %105 : vector<8x1xf32>
    %107 = vector.broadcast %94 : vector<8x1xf32> to vector<8x128xf32>
    %108 = arith.subf %87, %107 : vector<8x128xf32>
    %109 = arith.mulf %106, %7 : vector<8x1xf32>
    %110 = vector.broadcast %109 : vector<8x1xf32> to vector<8x128xf32>
    %111 = arith.mulf %108, %110 : vector<8x128xf32>
    %112 = vector.broadcast %8 : vector<8x1xf32> to vector<8x128xf32>
    %113 = arith.addf %111, %112 : vector<8x128xf32>
    %114 = arith.addf %88, %113 : vector<8x128xf32>
    %c0_39 = arith.constant 0 : index
    %c0_40 = arith.constant 0 : index
    %115 = vector.load %arg7[%c0_39, %c0_40] : memref<8x128xf32, #tpu.memory_space<vmem>>, vector<8x128xf32>
    tpu.vector_store %arg7[%c0_39, %c0_40], %114 {strides = array<i32>} : memref<8x128xf32, #tpu.memory_space<vmem>>, vector<8x128xf32>,
    return
  }
  func.func @transform_0(%arg0: i32) -> (i32, i32) {
    %c0_i32 = arith.constant 0 : i32
    %c0_i32_0 = arith.constant 0 : i32
    %c0_i32_1 = arith.constant 0 : i32
    return %c0_i32, %c0_i32_0 : i32, i32
  }
  func.func @transform_1(%arg0: i32) -> (i32, i32) {
    %c0_i32 = arith.constant 0 : i32
    %c0_i32_0 = arith.constant 0 : i32
    %c0_i32_1 = arith.constant 0 : i32
    return %c0_i32, %c0_i32_0 : i32, i32
  }
  func.func @transform_2(%arg0: i32) -> (i32, i32) {
    %c0_i32 = arith.constant 0 : i32
    %c0_i32_0 = arith.constant 0 : i32
    %c0_i32_1 = arith.constant 0 : i32
    return %c0_i32, %c0_i32_0 : i32, i32
  }
  func.func @transform_3(%arg0: i32) -> (i32, i32) {
    %c0_i32 = arith.constant 0 : i32
    %c0_i32_0 = arith.constant 0 : i32
    %c0_i32_1 = arith.constant 0 : i32
    return %c0_i32, %c0_i32_0 : i32, i32
  }
  func.func @transform_4(%arg0: i32) -> (i32, i32) {
    %c0_i32 = arith.constant 0 : i32
    %c0_i32_0 = arith.constant 0 : i32
    %c0_i32_1 = arith.constant 0 : i32
    return %c0_i32, %c0_i32_0 : i32, i32
  }
  func.func @transform_5(%arg0: i32) -> (i32, i32) {
    %c0_i32 = arith.constant 0 : i32
    %c0_i32_0 = arith.constant 0 : i32
    %c0_i32_1 = arith.constant 0 : i32
    return %c0_i32, %c0_i32_0 : i32, i32
  }
  func.func @transform_6(%arg0: i32) -> (i32, i32) {
    %c0_i32 = arith.constant 0 : i32
    %c0_i32_0 = arith.constant 0 : i32
    %c0_i32_1 = arith.constant 0 : i32
    return %c0_i32, %c0_i32_0 : i32, i32
  }
}

</mosaic_0001>

<llo_original>
// kernel: tpu_custom_call.1
$region0: #{tpu_custom_call.1}
  #allocation0 [shape = 'u32[]', space=smem, size = 0x4, offset = 0x4, fixed_abs, tag = 'smem constant byte address 0x4 - core index']
  #allocation1 [shape = 'u32[144,128]{1,0:T(1,128)}', space=vmem, size = 0x12000, scoped, tag = 'internal scratch']
  %s0 = inlined_call_operand.hbm [shape: f32[8,128], index: 0, kind: input, shape index: {}]
  %s1 = inlined_call_operand.vmem [shape: f32[1,128], index: 1, kind: input, shape index: {}]
  %s2 = inlined_call_operand.hbm [shape: f32[8,24], index: 2, kind: input, shape index: {}]
  %s3 = inlined_call_operand.hbm [shape: f32[8,24], index: 3, kind: input, shape index: {}]
  %s4 = inlined_call_operand.hbm [shape: f32[8,8], index: 4, kind: input, shape index: {}]
  %s5 = inlined_call_operand.vmem [shape: f32[8,9], index: 5, kind: input, shape index: {}]
  %s6 = inlined_call_operand.hbm [shape: f32[8,128], index: 6, kind: output, shape index: {}]
  %s7 = sld [smem:[#allocation0]]
  $region50: #{tpu_custom_call.1} parent=0
    _
  %s9 = ssub.s32 1, %s7
  %s10 = scalar_select 0, %s9, %s7
  $region1: #{tpu_custom_call.1} parent=0
    #allocation2 [shape = 'u8[4096]{0}', space=vmem, size = 0x1000, scoped, tag = 'input window, operand 0, single buffered']
    #allocation3 [shape = 's32[1]{0}', space=sflag, size = 0x4, scoped, tag = 'scoped memory for tpu_custom_call.1']
    #allocation4 [shape = 's32[1]{0}', space=sflag, size = 0x4, scoped, tag = 'scoped memory for tpu_custom_call.1']
    #allocation5 [shape = 'u8[4096]{0}', space=vmem, size = 0x1000, scoped, tag = 'input window, operand 2, single buffered']
    #allocation6 [shape = 's32[1]{0}', space=sflag, size = 0x4, scoped, tag = 'scoped memory for tpu_custom_call.1']
    #allocation7 [shape = 'u8[4096]{0}', space=vmem, size = 0x1000, scoped, tag = 'input window, operand 3, single buffered']
    #allocation8 [shape = 'u8[4096]{0}', space=vmem, size = 0x1000, scoped, tag = 'input window, operand 4, single buffered']
    #allocation9 [shape = 's32[1]{0}', space=sflag, size = 0x4, scoped, tag = 'scoped memory for tpu_custom_call.1']
    #allocation10 [shape = 'u8[4096]{0}', space=vmem, size = 0x1000, scoped, tag = 'output window, operand 0, single buffered']
    %11 = vsyncpa [#allocation3], 0
    %12 = vsyncpa [#allocation6], 0
    %13 = vsyncpa [#allocation9], 0
    %14 = vsyncpa [#allocation4], 0
    // Predicated region
    $region2: #{tpu_custom_call.1} parent=1 // pred_check
      _
    $region3: #{tpu_custom_call.1} parent=1 // pred_check_branch
      %16 = sbr.rel (0) target = $region5
    $region4: #{tpu_custom_call.1} parent=1 // pred_region
      %s18 = ssub.s32 128, 128
      %19 = vsyncadd [#allocation3], %s18
      %s21 = sshll.u32 [#allocation2], 4
      %s22 = int_to_ptr.vmem [resolvable:$true] %s21
      %24 = dma.hbm_to_vmem [thread:$0]  %s0, 128, %s22, [#allocation3]
    $region5: #{tpu_custom_call.1} parent=1 // pred_fallthru
      _
    // Predicated region
    $region6: #{tpu_custom_call.1} parent=1 // pred_check
      _
    $region7: #{tpu_custom_call.1} parent=1 // pred_check_branch
      %26 = sbr.rel (0) target = $region9
    $region8: #{tpu_custom_call.1} parent=1 // pred_region
      _
    $region9: #{tpu_custom_call.1} parent=1 // pred_fallthru
      _
    // Predicated region
    $region10: #{tpu_custom_call.1} parent=1 // pred_check
      _
    $region11: #{tpu_custom_call.1} parent=1 // pred_check_branch
      %28 = sbr.rel (0) target = $region13
    $region12: #{tpu_custom_call.1} parent=1 // pred_region
      %s30 = ssub.s32 128, 128
      %31 = vsyncadd [#allocation6], %s30
      %s33 = sshll.u32 [#allocation5], 4
      %s34 = int_to_ptr.vmem [resolvable:$true] %s33
      %36 = dma.hbm_to_vmem [thread:$0]  %s2, 128, %s34, [#allocation6]
    $region13: #{tpu_custom_call.1} parent=1 // pred_fallthru
      _
    // Predicated region
    $region14: #{tpu_custom_call.1} parent=1 // pred_check
      _
    $region15: #{tpu_custom_call.1} parent=1 // pred_check_branch
      %38 = sbr.rel (0) target = $region17
    $region16: #{tpu_custom_call.1} parent=1 // pred_region
      %s40 = ssub.s32 128, 128
      %41 = vsyncadd [#allocation6], %s40
      %s43 = sshll.u32 [#allocation7], 4
      %s44 = int_to_ptr.vmem [resolvable:$true] %s43
      %46 = dma.hbm_to_vmem [thread:$0]  %s3, 128, %s44, [#allocation6]
    $region17: #{tpu_custom_call.1} parent=1 // pred_fallthru
      _
    // Predicated region
    $region18: #{tpu_custom_call.1} parent=1 // pred_check
      _
    $region19: #{tpu_custom_call.1} parent=1 // pred_check_branch
      %48 = sbr.rel (0) target = $region21
    $region20: #{tpu_custom_call.1} parent=1 // pred_region
      %s50 = ssub.s32 128, 128
      %51 = vsyncadd [#allocation9], %s50
      %s53 = sshll.u32 [#allocation8], 4
      %s54 = int_to_ptr.vmem [resolvable:$true] %s53
      %56 = dma.hbm_to_vmem [thread:$0]  %s4, 128, %s54, [#allocation9]
    $region21: #{tpu_custom_call.1} parent=1 // pred_fallthru
      _
    // Predicated region
    $region22: #{tpu_custom_call.1} parent=1 // pred_check
      _
    $region23: #{tpu_custom_call.1} parent=1 // pred_check_branch
      %58 = sbr.rel (0) target = $region25
    $region24: #{tpu_custom_call.1} parent=1 // pred_region
      _
    $region25: #{tpu_custom_call.1} parent=1 // pred_fallthru
      _
    // Predicated region
    $region26: #{tpu_custom_call.1} parent=1 // pred_check
      _
    $region27: #{tpu_custom_call.1} parent=1 // pred_check_branch
      %60 = sbr.rel (0) target = $region29
    $region28: #{tpu_custom_call.1} parent=1 // pred_region
      %61 = dma.done [#allocation3], 128
    $region29: #{tpu_custom_call.1} parent=1 // pred_fallthru
      _
    // Predicated region
    $region30: #{tpu_custom_call.1} parent=1 // pred_check
      _
    $region31: #{tpu_custom_call.1} parent=1 // pred_check_branch
      %63 = sbr.rel (0) target = $region33
    $region32: #{tpu_custom_call.1} parent=1 // pred_region
      %64 = dma.done [#allocation6], 128
    $region33: #{tpu_custom_call.1} parent=1 // pred_fallthru
      _
    // Predicated region
    $region34: #{tpu_custom_call.1} parent=1 // pred_check
      _
    $region35: #{tpu_custom_call.1} parent=1 // pred_check_branch
      %66 = sbr.rel (0) target = $region37
    $region36: #{tpu_custom_call.1} parent=1 // pred_region
      %67 = dma.done [#allocation6], 128
    $region37: #{tpu_custom_call.1} parent=1 // pred_fallthru
      _
    // Predicated region
    $region38: #{tpu_custom_call.1} parent=1 // pred_check
      _
    $region39: #{tpu_custom_call.1} parent=1 // pred_check_branch
      %69 = sbr.rel (0) target = $region41
    $region40: #{tpu_custom_call.1} parent=1 // pred_region
      %70 = dma.done [#allocation9], 128
    $region41: #{tpu_custom_call.1} parent=1 // pred_fallthru
      _
    %v71 = vld [vmem:[#allocation2] sm:$0xff]
    %v72 = vld [vmem:[%s1] sm:$0x1]
    %v73 = vld [vmem:[%s5] sm:$0xff]
    %v74 = vld [vmem:[#allocation5] sm:$0xff]
    %75 = vrot.lane.b32.xlu0 %v71, 1
    %v76 = vpop.permute.xlu0 %75
    %77 = vrot.lane.b32.xlu0 %v71, 127
    %v78 = vpop.permute.xlu0 %77
    %80 = vset.pattern.permute.xlu0 0
    %81 = vperm.xlu0 %80, %v73
    %v82 = vpop.permute.xlu0 %81
    %vm84 = vcmask 195584
    %v86 = vsel %vm84, %v74, 0
    %88 = vmatprep.subr.mxu0 0.0
    %89 = vmatpush1.msra.mxu0 0.0
    %90 = vmatprep.subr.mxu0 0.0
    %91 = vmatpush1.msra.mxu0 0.0
    %92 = vmatprep.subr.mxu0 0.0
    %93 = vmatpush1.msra.mxu0 0.0
    %94 = vmatprep.subr.mxu0 0.0
    %95 = vmatpush1.msra.mxu0 0.0
    %96 = vmatprep.subr.mxu0 0.0
    %97 = vmatpush1.msra.mxu0 0.0
    %98 = vmatprep.subr.mxu0 0.0
    %99 = vmatpush1.msra.mxu0 0.0
    %100 = vmatprep.subr.mxu0 0.0
    %101 = vmatpush1.msra.mxu0 0.0
    %102 = vmatprep.subr.mxu0 0.0
    %103 = vmatpush1.msra.mxu0 0.0
    %104 = vmatprep.subr.mxu0 0.0
    %105 = vmatpush1.msra.mxu0 0.0
    %106 = vmatprep.subr.mxu0 0.0
    %107 = vmatpush1.msra.mxu0 0.0
    %108 = vmatprep.subr.mxu0 0.0
    %109 = vmatpush1.msra.mxu0 0.0
    %110 = vmatprep.subr.mxu0 0.0
    %111 = vmatpush1.msra.mxu0 0.0
    %112 = vmatprep.subr.mxu0 0.0
    %113 = vmatpush1.msra.mxu0 0.0
    %114 = vmatprep.subr.mxu0 0.0
    %115 = vmatpush1.msra.mxu0 %v78
    %116 = vmatprep.subr.mxu0 0.0
    %117 = vmatpush1.msra.mxu0 %v71
    %118 = vmatprep.subr.mxu0 0.0
    %119 = vmatpush1.msra.mxu0 %v76
    %120 = vmatprep.subr.mxu0 0.0
    %121 = vmatpush2.msra.mxu0 0.0
    %122 = vmatprep.subr.mxu0 0.0
    %123 = vmatpush2.msra.mxu0 0.0
    %124 = vmatprep.subr.mxu0 0.0
    %125 = vmatpush2.msra.mxu0 0.0
    %126 = vmatprep.subr.mxu0 0.0
    %127 = vmatpush2.msra.mxu0 0.0
    %128 = vmatprep.subr.mxu0 0.0
    %129 = vmatpush2.msra.mxu0 0.0
    %130 = vmatprep.subr.mxu0 0.0
    %131 = vmatpush2.msra.mxu0 0.0
    %132 = vmatprep.subr.mxu0 0.0
    %133 = vmatpush2.msra.mxu0 0.0
    %134 = vmatprep.subr.mxu0 0.0
    %135 = vmatpush2.msra.mxu0 0.0
    %136 = vmatprep.subr.mxu0 0.0
    %137 = vmatpush2.msra.mxu0 0.0
    %138 = vmatprep.subr.mxu0 0.0
    %139 = vmatpush2.msra.mxu0 0.0
    %140 = vmatprep.subr.mxu0 0.0
    %141 = vmatpush2.msra.mxu0 0.0
    %142 = vmatprep.subr.mxu0 0.0
    %143 = vmatpush2.msra.mxu0 0.0
    %144 = vmatprep.subr.mxu0 0.0
    %145 = vmatpush2.msra.mxu0 0.0
    %146 = vmatprep.subr.mxu0 0.0
    %147 = vmatpush2.msra.mxu0 0.0
    %148 = vmatprep.subr.mxu0 0.0
    %149 = vmatpush2.msra.mxu0 0.0
    %150 = vmatprep.subr.mxu0 0.0
    %151 = vmatpush2.msra.mxu0 0.0
    %152 = vmatprep.mubr.f32.mxu0 0.0
    %153 = vmatmul.mubr.f32.gmra.mxu0 %v86
    %v154 = vpop.f32.mrf.mxu0
    %v155 = vadd.f32 %v82, %v154
    %v156 = vpop.f32.mrf.mxu0
    %157 = vdwg.mxu0
    %v159 = vlaneseq
    %v160 = vshrl.u32 %v159, 7
    %v161 = vsub.s32 0, %v160
    %v162 = vrot.slane %v72, %v161
    %v164 = vmul.f32 %v155, %v162
    %165 = vadd.xlane.f32.xlu0 %v164
    %v166 = vpop.xlane.xlu0 %165
    %v167 = vmul.f32 %v166, 0.03125
    %v168 = vmul.f32 %v164, %v155
    %169 = vadd.xlane.f32.xlu0 %v168
    %v170 = vpop.xlane.xlu0 %169
    %v171 = vmul.f32 %v170, 0.03125
    %v172 = vmul.f32 %v167, %v167
    %v173 = vsub.f32 %v171, %v172
    %v174 = vmax.f32 %v173, 0.0
    %v175 = vadd.f32 %v174, 1e-05
    %v176 = vrsqrt.pop %v175
    %v177 = vsub.f32 %v155, %v167
    %v178 = vmul.f32 %v176, %v73
    %180 = vset.pattern.permute.xlu0 1
    %181 = vperm.xlu0 %180, %v178
    %v182 = vpop.permute.xlu0 %181
    %v184 = vmul.f32 %v177, %v182
    %185 = vset.pattern.permute.xlu0 2
    %186 = vperm.xlu0 %185, %v73
    %v187 = vpop.permute.xlu0 %186
    %v189 = vadd.f32 %v184, %v187
    %vm190 = vcmp.gt.f32.partialorder %v189, 0.0
    %v191 = vmul.f32 %v189, 0.01
    %v192 = vsel %vm190, %v189, %v191
    %v193 = vmul.f32 %v192, %v162
    %v194 = vld [vmem:[#allocation8] sm:$0xff]
    %195 = vset.pattern.permute.xlu0 6
    %196 = vperm.xlu0 %195, %v73
    %v197 = vpop.permute.xlu0 %196
    %vm199 = vcmask 64512
    %v201 = vsel %vm199, %v194, 0
    %203 = vmatprep.subr.mxu0 0.0
    %204 = vmatpush1.msra.mxu0 0.0
    %205 = vmatprep.subr.mxu0 0.0
    %206 = vmatpush1.msra.mxu0 0.0
    %207 = vmatprep.subr.mxu0 0.0
    %208 = vmatpush1.msra.mxu0 0.0
    %209 = vmatprep.subr.mxu0 0.0
    %210 = vmatpush1.msra.mxu0 0.0
    %211 = vmatprep.subr.mxu0 0.0
    %212 = vmatpush1.msra.mxu0 0.0
    %213 = vmatprep.subr.mxu0 0.0
    %214 = vmatpush1.msra.mxu0 0.0
    %215 = vmatprep.subr.mxu0 0.0
    %216 = vmatpush1.msra.mxu0 0.0
    %217 = vmatprep.subr.mxu0 0.0
    %218 = vmatpush1.msra.mxu0 0.0
    %219 = vmatprep.subr.mxu0 0.0
    %220 = vmatpush1.msra.mxu0 0.0
    %221 = vmatprep.subr.mxu0 0.0
    %222 = vmatpush1.msra.mxu0 0.0
    %223 = vmatprep.subr.mxu0 0.0
    %224 = vmatpush1.msra.mxu0 0.0
    %225 = vmatprep.subr.mxu0 0.0
    %226 = vmatpush1.msra.mxu0 0.0
    %227 = vmatprep.subr.mxu0 0.0
    %228 = vmatpush1.msra.mxu0 0.0
    %229 = vmatprep.subr.mxu0 0.0
    %230 = vmatpush1.msra.mxu0 0.0
    %231 = vmatprep.subr.mxu0 0.0
    %232 = vmatpush1.msra.mxu0 0.0
    %233 = vmatprep.subr.mxu0 0.0
    %234 = vmatpush1.msra.mxu0 %v71
    %235 = vmatprep.subr.mxu0 0.0
    %236 = vmatpush2.msra.mxu0 0.0
    %237 = vmatprep.subr.mxu0 0.0
    %238 = vmatpush2.msra.mxu0 0.0
    %239 = vmatprep.subr.mxu0 0.0
    %240 = vmatpush2.msra.mxu0 0.0
    %241 = vmatprep.subr.mxu0 0.0
    %242 = vmatpush2.msra.mxu0 0.0
    %243 = vmatprep.subr.mxu0 0.0
    %244 = vmatpush2.msra.mxu0 0.0
    %245 = vmatprep.subr.mxu0 0.0
    %246 = vmatpush2.msra.mxu0 0.0
    %247 = vmatprep.subr.mxu0 0.0
    %248 = vmatpush2.msra.mxu0 0.0
    %249 = vmatprep.subr.mxu0 0.0
    %250 = vmatpush2.msra.mxu0 0.0
    %251 = vmatprep.subr.mxu0 0.0
    %252 = vmatpush2.msra.mxu0 0.0
    %253 = vmatprep.subr.mxu0 0.0
    %254 = vmatpush2.msra.mxu0 0.0
    %255 = vmatprep.subr.mxu0 0.0
    %256 = vmatpush2.msra.mxu0 0.0
    %257 = vmatprep.subr.mxu0 0.0
    %258 = vmatpush2.msra.mxu0 0.0
    %259 = vmatprep.subr.mxu0 0.0
    %260 = vmatpush2.msra.mxu0 0.0
    %261 = vmatprep.subr.mxu0 0.0
    %262 = vmatpush2.msra.mxu0 0.0
    %263 = vmatprep.subr.mxu0 0.0
    %264 = vmatpush2.msra.mxu0 0.0
    %265 = vmatprep.subr.mxu0 0.0
    %266 = vmatpush2.msra.mxu0 0.0
    %267 = vmatprep.mubr.f32.mxu0 0.0
    %268 = vmatmul.mubr.f32.gmra.mxu0 %v201
    %v269 = vpop.f32.mrf.mxu0
    %v270 = vadd.f32 %v197, %v269
    %v271 = vpop.f32.mrf.mxu0
    %272 = vdwg.mxu0
    %v273 = vmul.f32 %v270, %v162
    %274 = vadd.xlane.f32.xlu0 %v273
    %v275 = vpop.xlane.xlu0 %274
    %v276 = vmul.f32 %v275, 0.03125
    %v277 = vmul.f32 %v273, %v270
    %278 = vadd.xlane.f32.xlu0 %v277
    %v279 = vpop.xlane.xlu0 %278
    %v280 = vmul.f32 %v279, 0.03125
    %v281 = vmul.f32 %v276, %v276
    %v282 = vsub.f32 %v280, %v281
    %v283 = vmax.f32 %v282, 0.0
    %v284 = vadd.f32 %v283, 1e-05
    %v285 = vrsqrt.pop %v284
    %v286 = vsub.f32 %v270, %v276
    %v287 = vmul.f32 %v285, %v73
    %289 = vset.pattern.permute.xlu0 7
    %290 = vperm.xlu0 %289, %v287
    %v291 = vpop.permute.xlu0 %290
    %v293 = vmul.f32 %v286, %v291
    %294 = vset.pattern.permute.xlu0 8
    %295 = vperm.xlu0 %294, %v73
    %v296 = vpop.permute.xlu0 %295
    %v298 = vadd.f32 %v293, %v296
    %299 = vst [vmem:[#allocation10] sm:$0xff] %v298
    %v300 = vld [vmem:[#allocation7] sm:$0xff]
    %301 = vrot.lane.b32.xlu0 %v193, 1
    %v302 = vpop.permute.xlu0 %301
    %303 = vrot.lane.b32.xlu0 %v193, 127
    %v304 = vpop.permute.xlu0 %303
    %305 = vset.pattern.permute.xlu0 3
    %306 = vperm.xlu0 %305, %v73
    %v307 = vpop.permute.xlu0 %306
    %v310 = vsel %vm84, %v300, 0
    %312 = vmatprep.subr.mxu0 0.0
    %313 = vmatpush1.msra.mxu0 0.0
    %314 = vmatprep.subr.mxu0 0.0
    %315 = vmatpush1.msra.mxu0 0.0
    %316 = vmatprep.subr.mxu0 0.0
    %317 = vmatpush1.msra.mxu0 0.0
    %318 = vmatprep.subr.mxu0 0.0
    %319 = vmatpush1.msra.mxu0 0.0
    %320 = vmatprep.subr.mxu0 0.0
    %321 = vmatpush1.msra.mxu0 0.0
    %322 = vmatprep.subr.mxu0 0.0
    %323 = vmatpush1.msra.mxu0 0.0
    %324 = vmatprep.subr.mxu0 0.0
    %325 = vmatpush1.msra.mxu0 0.0
    %326 = vmatprep.subr.mxu0 0.0
    %327 = vmatpush1.msra.mxu0 0.0
    %328 = vmatprep.subr.mxu0 0.0
    %329 = vmatpush1.msra.mxu0 0.0
    %330 = vmatprep.subr.mxu0 0.0
    %331 = vmatpush1.msra.mxu0 0.0
    %332 = vmatprep.subr.mxu0 0.0
    %333 = vmatpush1.msra.mxu0 0.0
    %334 = vmatprep.subr.mxu0 0.0
    %335 = vmatpush1.msra.mxu0 0.0
    %336 = vmatprep.subr.mxu0 0.0
    %337 = vmatpush1.msra.mxu0 0.0
    %338 = vmatprep.subr.mxu0 0.0
    %339 = vmatpush1.msra.mxu0 %v304
    %340 = vmatprep.subr.mxu0 0.0
    %341 = vmatpush1.msra.mxu0 %v193
    %342 = vmatprep.subr.mxu0 0.0
    %343 = vmatpush1.msra.mxu0 %v302
    %344 = vmatprep.subr.mxu0 0.0
    %345 = vmatpush2.msra.mxu0 0.0
    %346 = vmatprep.subr.mxu0 0.0
    %347 = vmatpush2.msra.mxu0 0.0
    %348 = vmatprep.subr.mxu0 0.0
    %349 = vmatpush2.msra.mxu0 0.0
    %350 = vmatprep.subr.mxu0 0.0
    %351 = vmatpush2.msra.mxu0 0.0
    %352 = vmatprep.subr.mxu0 0.0
    %353 = vmatpush2.msra.mxu0 0.0
    %354 = vmatprep.subr.mxu0 0.0
    %355 = vmatpush2.msra.mxu0 0.0
    %356 = vmatprep.subr.mxu0 0.0
    %357 = vmatpush2.msra.mxu0 0.0
    %358 = vmatprep.subr.mxu0 0.0
    %359 = vmatpush2.msra.mxu0 0.0
    %360 = vmatprep.subr.mxu0 0.0
    %361 = vmatpush2.msra.mxu0 0.0
    %362 = vmatprep.subr.mxu0 0.0
    %363 = vmatpush2.msra.mxu0 0.0
    %364 = vmatprep.subr.mxu0 0.0
    %365 = vmatpush2.msra.mxu0 0.0
    %366 = vmatprep.subr.mxu0 0.0
    %367 = vmatpush2.msra.mxu0 0.0
    %368 = vmatprep.subr.mxu0 0.0
    %369 = vmatpush2.msra.mxu0 0.0
    %370 = vmatprep.subr.mxu0 0.0
    %371 = vmatpush2.msra.mxu0 0.0
    %372 = vmatprep.subr.mxu0 0.0
    %373 = vmatpush2.msra.mxu0 0.0
    %374 = vmatprep.subr.mxu0 0.0
    %375 = vmatpush2.msra.mxu0 0.0
    %376 = vmatprep.mubr.f32.mxu0 0.0
    %377 = vmatmul.mubr.f32.gmra.mxu0 %v310
    %v378 = vpop.f32.mrf.mxu0
    %v379 = vadd.f32 %v307, %v378
    %v380 = vpop.f32.mrf.mxu0
    %381 = vdwg.mxu0
    %v382 = vld [vmem:[#allocation10] sm:$0xff]
    %v383 = vmul.f32 %v379, %v162
    %384 = vadd.xlane.f32.xlu0 %v383
    %v385 = vpop.xlane.xlu0 %384
    %v386 = vmul.f32 %v385, 0.03125
    %v387 = vmul.f32 %v383, %v379
    %388 = vadd.xlane.f32.xlu0 %v387
    %v389 = vpop.xlane.xlu0 %388
    %v390 = vmul.f32 %v389, 0.03125
    %v391 = vmul.f32 %v386, %v386
    %v392 = vsub.f32 %v390, %v391
    %v393 = vmax.f32 %v392, 0.0
    %v394 = vadd.f32 %v393, 1e-05
    %v395 = vrsqrt.pop %v394
    %v396 = vsub.f32 %v379, %v386
    %v397 = vmul.f32 %v395, %v73
    %399 = vset.pattern.permute.xlu0 4
    %400 = vperm.xlu0 %399, %v397
    %v401 = vpop.permute.xlu0 %400
    %v403 = vmul.f32 %v396, %v401
    %404 = vset.pattern.permute.xlu0 5
    %405 = vperm.xlu0 %404, %v73
    %v406 = vpop.permute.xlu0 %405
    %v408 = vadd.f32 %v403, %v406
    %v409 = vadd.f32 %v382, %v408
    %410 = vst [vmem:[#allocation10] sm:$0xff] %v409
    // Predicated region
    $region42: #{tpu_custom_call.1} parent=1 // pred_check
      _
    $region43: #{tpu_custom_call.1} parent=1 // pred_check_branch
      %412 = sbr.rel (0) target = $region45
    $region44: #{tpu_custom_call.1} parent=1 // pred_region
      %s414 = ssub.s32 128, 128
      %415 = vsyncadd [#allocation4], %s414
      %s417 = sshll.u32 [#allocation10], 4
      %s418 = int_to_ptr.vmem [resolvable:$true] %s417
      %420 = dma.vmem_to_hbm [thread:$0]  %s418, 128, %s6, [#allocation4]
    $region45: #{tpu_custom_call.1} parent=1 // pred_fallthru
      _
    // Predicated region
    $region46: #{tpu_custom_call.1} parent=1 // pred_check
      _
    $region47: #{tpu_custom_call.1} parent=1 // pred_check_branch
      %422 = sbr.rel (0) target = $region49
    $region48: #{tpu_custom_call.1} parent=1 // pred_region
      %423 = dma.done [#allocation4], 128
    $region49: #{tpu_custom_call.1} parent=1 // pred_fallthru
      _
    %424 = vsyncpa [#allocation3], 1
    %425 = vsyncpa [#allocation6], 1
    %426 = vsyncpa [#allocation9], 1
    %427 = vsyncpa [#allocation4], 1

</llo_original>
